<compile_context>
chip_gen: v7x
topology: tpu7x:2x2x1
jax: 0.10.0
libtpu: 0.0.40
codegen_flags: <defaults>
</compile_context>

<pallas_src>
import functools
import math

import jax
import jax.numpy as jnp
import numpy as np
from jax.experimental import pallas as pl
from jax.experimental.pallas import tpu as pltpu

_VMEM_LIMIT_BYTES = 48 << 20          # raised scoped-VMEM limit; < v7x 64 MiB physical
_RESIDENT_TABLE_MAX_BYTES = 16 << 20  # table kept VMEM-resident only below this
_HBM_GATHER_NSEM = 32                 # in-flight row DMAs on the fallback path


def _round_up(x: int, m: int) -> int:
    return (x + m - 1) // m * m


def _pad2(a: jax.Array, rows: int, cols: int) -> jax.Array:
    r, c = a.shape
    if (rows, cols) == (r, c):
        return a
    return jnp.pad(a, ((0, rows - r), (0, cols - c)))


def _pick_token_block(n: int, token_block: int, tb_cap: int) -> int:
    tb = max(8, min(token_block, tb_cap, _round_up(n, 8)))
    # Prefer >= 2 blocks so the "parallel" grid axis can shard across both
    # TensorCores on v7x (harmless on single-TC v5e/v6e).
    if _round_up(n, tb) // tb < 2 and n > 8:
        tb = max(8, min(tb, _round_up((n + 1) // 2, 8)))
    return tb


# ----------------------------------------------------------------------------
# Fast path: VMEM-resident table, one-hot MXU gather.
# ----------------------------------------------------------------------------
def _onehot_embed_kernel(ids_ref, table_ref, out_ref, *, scale):
    # ids_ref:   (tb, 1) int32      token ids of this block
    # table_ref: (vocab_p, emb_p)   whole table, VMEM resident (constant index_map)
    # out_ref:   (tb, emb_p)
    tb = ids_ref.shape[0]
    vocab_p = table_ref.shape[0]
    ids = ids_ref[...]                                             # (tb, 1)
    iota = jax.lax.broadcasted_iota(jnp.int32, (tb, vocab_p), 1)   # lane iota
    one_hot = (iota == ids).astype(table_ref.dtype)                # (tb, vocab_p)
    acc = jnp.dot(one_hot, table_ref[...], preferred_element_type=jnp.float32)
    out_ref[...] = (acc * scale).astype(out_ref.dtype)


def _resident_embed_call(ids_padded, table, tb, scale):
    n_pad = ids_padded.shape[0]
    vocab_p, emb_p = table.shape
    return pl.pallas_call(
        functools.partial(_onehot_embed_kernel, scale=scale),
        out_shape=jax.ShapeDtypeStruct((n_pad, emb_p), table.dtype),
        grid=(n_pad // tb,),
        in_specs=[
            pl.BlockSpec((tb, 1), lambda i: (i, 0)),
            # Constant index_map: the table is DMA'd HBM->VMEM once and stays
            # resident for every grid step.
            pl.BlockSpec((vocab_p, emb_p), lambda i: (0, 0)),
        ],
        out_specs=pl.BlockSpec((tb, emb_p), lambda i: (i, 0)),
        compiler_params=pltpu.CompilerParams(
            dimension_semantics=("parallel",),
            vmem_limit_bytes=_VMEM_LIMIT_BYTES,
        ),
    )(ids_padded.reshape(n_pad, 1), table)


# ----------------------------------------------------------------------------
# Fallback path: table stays in HBM, manual row-gather DMAs into the out tile.
# ----------------------------------------------------------------------------
def _make_hbm_gather_kernel(tb: int, nsem: int, scale: float):
    def kernel(tok_ref, nvalid_ref, emb_hbm, out_ref, sems):
        # tok_ref:    SMEM (n_pad,) int32 scalar-prefetched token ids
        # nvalid_ref: SMEM (1,) int32 number of real (non-padded) tokens
        # emb_hbm:    (vocab, emb_p) table left in HBM (pl.ANY)
        # out_ref:    (tb, emb_p) VMEM output tile (rows DMA'd directly here)
        # sems:       (nsem,) DMA semaphores -> nsem row gathers in flight
        base = pl.program_id(0) * tb
        n_valid = nvalid_ref[0]

        def start_row(j, tok):
            pltpu.make_async_copy(
                emb_hbm.at[pl.ds(tok, 1)],
                out_ref.at[pl.ds(j, 1)],
                sems.at[j % nsem],
            ).start()

        def wait_row(j):
            # Source index is irrelevant for .wait(); only size/sem matter.
            pltpu.make_async_copy(
                emb_hbm.at[pl.ds(0, 1)],
                out_ref.at[pl.ds(j, 1)],
                sems.at[j % nsem],
            ).wait()

        @pl.loop(0, nsem)
        def _prime(j):
            tok = tok_ref[base + j]

            @pl.when(base + j < n_valid)
            def _():
                start_row(j, tok)

        @pl.loop(nsem, tb)
        def _steady(j):
            # Read the scalar id BEFORE .wait(): waits break SMEM sst->sld
            # forwarding even for untouched addresses.
            tok = tok_ref[base + j]

            @pl.when(base + (j - nsem) < n_valid)
            def _():
                wait_row(j - nsem)

            @pl.when(base + j < n_valid)
            def _():
                start_row(j, tok)

        @pl.loop(tb - nsem, tb)
        def _drain(j):
            @pl.when(base + j < n_valid)
            def _():
                wait_row(j)

        # Fused sqrt(emb_size) scale applied in place on the dense tile.
        out_ref[...] = out_ref[...] * scale

    return kernel


def _hbm_gather_call(tok_padded, n_valid, table, tb, scale):
    n_pad = tok_padded.shape[0]
    _, emb_p = table.shape
    nsem = min(_HBM_GATHER_NSEM, tb)
    grid_spec = pltpu.PrefetchScalarGridSpec(
        num_scalar_prefetch=2,
        grid=(n_pad // tb,),
        in_specs=[
            pl.BlockSpec(memory_space=pl.ANY),  # table stays in HBM
        ],
        out_specs=pl.BlockSpec((tb, emb_p), lambda i, tok, nv: (i, 0)),
        scratch_shapes=[pltpu.SemaphoreType.DMA((nsem,))],
    )
    return pl.pallas_call(
        _make_hbm_gather_kernel(tb, nsem, scale),
        out_shape=jax.ShapeDtypeStruct((n_pad, emb_p), table.dtype),
        grid_spec=grid_spec,
        compiler_params=pltpu.CompilerParams(
            dimension_semantics=("parallel",),
            vmem_limit_bytes=_VMEM_LIMIT_BYTES,
        ),
    )(tok_padded, n_valid, table)


# ----------------------------------------------------------------------------
# Public wrapper: TokenEmbedding.forward
# ----------------------------------------------------------------------------
def token_embedding(tokens: jax.Array, emb_table: jax.Array, *,
                    token_block: int = 1024,
                    force_hbm_gather: bool = False,
                    max_tokens_per_call: int = 32768) -> jax.Array:
    """Pallas equivalent of TokenEmbedding.forward.

    tokens:    int array, shape (seq_len, batch) (time-major, as in the tutorial)
    emb_table: float array, shape (vocab_size, emb_size) (nn.Embedding.weight)
    returns:   emb_table.dtype, shape (seq_len, batch, emb_size)
    """
    seq_len, batch = tokens.shape
    vocab, emb = emb_table.shape
    n = seq_len * batch
    scale = math.sqrt(emb)
    itemsize = jnp.dtype(emb_table.dtype).itemsize

    # tokens.long() -> int32 indexing on TPU. Clamp so a stray PAD = -1 /
    # out-of-range id cannot gather out of bounds (intentional divergence from
    # nn.Embedding, which would raise).
    ids = jnp.clip(tokens.reshape(n).astype(jnp.int32), 0, vocab - 1)

    emb_p = _round_up(emb, 128)       # lane-dense (unmasked) stores
    vocab_p = _round_up(vocab, 256)   # MXU-aligned contraction
    table_bytes = vocab_p * emb_p * itemsize
    use_resident = (not force_hbm_gather) and table_bytes <= _RESIDENT_TABLE_MAX_BYTES

    if use_resident:
        table = _pad2(emb_table, vocab_p, emb_p)
        # Cap tb so table (worst case x2 buffering) + double-buffered output
        # tiles + one-hot intermediates stay inside the scoped VMEM limit
        # (v7x only has 64 MiB total).
        usable = _VMEM_LIMIT_BYTES - 2 * table_bytes - (4 << 20)
        per_tok = 2 * emb_p * itemsize + 4 * emb_p + vocab_p * (itemsize + 4) + 1024
        tb_cap = max(8, usable // per_tok // 8 * 8)
        tb = _pick_token_block(n, token_block, tb_cap)
        n_pad = _round_up(n, tb)
        ids_p = jnp.pad(ids, (0, n_pad - n))  # padded ids select row 0; sliced off below
        out = _resident_embed_call(ids_p, table, tb, scale)[:n]
    else:
        table = _pad2(emb_table, vocab, emb_p)
        # Keep 2 x (tb, emb_p) output tiles under ~24 MiB (v7x-safe).
        tb_cap = max(8, (24 << 20) // (2 * emb_p * itemsize) // 8 * 8)
        tb = _pick_token_block(n, token_block, tb_cap)
        # Chunk only on this fallback path to bound the SMEM scalar-prefetch
        # id buffer; the resident fast path is always a single pallas_call.
        chunk = _round_up(min(max_tokens_per_call, n), tb)
        outs = []
        for start in range(0, n, chunk):
            cur = min(chunk, n - start)
            n_pad = _round_up(cur, tb)
            toks = ids[start:start + cur]
            if n_pad != cur:
                toks = jnp.pad(toks, (0, n_pad - cur))
            n_valid = jnp.array([cur], dtype=jnp.int32)
            outs.append(_hbm_gather_call(toks, n_valid, table, tb, scale)[:cur])
        out = outs[0] if len(outs) == 1 else jnp.concatenate(outs, axis=0)

    return out[:, :emb].reshape(seq_len, batch, emb)


def _reference(tokens, emb_table):
    vocab, emb = emb_table.shape
    ids = jnp.clip(tokens.reshape(-1).astype(jnp.int32), 0, vocab - 1)
    out = jnp.take(emb_table, ids, axis=0) * math.sqrt(emb)
    return out.reshape(*tokens.shape, emb)


if __name__ == "__main__":
    vocab_size, emb_size = 64, 128
    key = jax.random.PRNGKey(0)
    k_emb, k_tok, k_tok2 = jax.random.split(key, 3)

    emb_table = jax.random.normal(k_emb, (vocab_size, emb_size), dtype=jnp.float32)

    # Case 1: the module's toy shape, time-major (seq_len, batch) -> resident path.
    tokens = jax.random.randint(k_tok, (8, 2), 0, vocab_size, dtype=jnp.int32)
    out = jax.block_until_ready(token_embedding(tokens, emb_table))
    np.testing.assert_allclose(np.asarray(out), np.asarray(_reference(tokens, emb_table)),
                               rtol=1e-6, atol=1e-6)

    # Case 2: multi-block grid + tail padding on the resident fast path
    # (n = 320, token_block = 128 -> 3 blocks, 64 padded rows).
    tokens2 = jax.random.randint(k_tok2, (40, 8), 0, vocab_size, dtype=jnp.int32)
    out2 = jax.block_until_ready(token_embedding(tokens2, emb_table, token_block=128))
    np.testing.assert_allclose(np.asarray(out2), np.asarray(_reference(tokens2, emb_table)),
                               rtol=1e-6, atol=1e-6)

    # Case 3: force the HBM row-gather fallback (deep DMA pipeline, tail guard).
    out3 = jax.block_until_ready(
        token_embedding(tokens2, emb_table, token_block=128, force_hbm_gather=True))
    np.testing.assert_allclose(np.asarray(out3), np.asarray(_reference(tokens2, emb_table)),
                               rtol=1e-6, atol=1e-6)

    print("KERNEL_OK")
</pallas_src>

<mosaic_0001>
module attributes {stable_mosaic.version = 11 : i64} {
  func.func @_onehot_embed_kernel(%arg0: i32, %arg1: memref<8x1xi32, #tpu.memory_space<vmem>>, %arg2: memref<256x128xf32, #tpu.memory_space<vmem>>, %arg3: memref<8x128xf32, #tpu.memory_space<vmem>>) attributes {dimension_semantics = [#tpu.dimension_semantics<parallel>], iteration_bounds = array<i64: 2>, scalar_prefetch = 0 : i64, scratch_operands = 0 : i64, tpu.core_type = #tpu.core_type<tc>, window_params = [{transform_indices = @transform_0, window_bounds = array<i64: 8, 1>}, {pipeline_mode = #tpu.pipeline_mode<synchronous>, transform_indices = @transform_1, window_bounds = array<i64: 256, 128>}, {transform_indices = @transform_2, window_bounds = array<i64: 8, 128>}]} {
    %c0 = arith.constant 0 : index
    %c0_0 = arith.constant 0 : index
    %0 = vector.load %arg1[%c0, %c0_0] : memref<8x1xi32, #tpu.memory_space<vmem>>, vector<8x1xi32>
    %1 = tpu.iota {dimensions = array<i32: 1>} : vector<8x256xi32>
    %2 = vector.broadcast %0 : vector<8x1xi32> to vector<8x256xi32>
    %3 = arith.cmpi eq, %1, %2 : vector<8x256xi32>
    %4 = arith.extui %3 : vector<8x256xi1> to vector<8x256xi32>
    %5 = arith.sitofp %4 : vector<8x256xi32> to vector<8x256xf32>
    %c0_1 = arith.constant 0 : index
    %c0_2 = arith.constant 0 : index
    %6 = vector.load %arg2[%c0_1, %c0_2] : memref<256x128xf32, #tpu.memory_space<vmem>>, vector<256x128xf32>
    %cst = arith.constant dense<0.000000e+00> : vector<8x128xf32>
    %7 = tpu.matmul %5, %6, %cst {dimension_numbers = #tpu.dot_dimension_numbers<[1], [0], [0], [1], [0, 0, 1, 1], [], []>} : vector<8x256xf32>, vector<256x128xf32>, vector<8x128xf32> -> vector<8x128xf32>
    %cst_3 = arith.constant 11.3137083 : f32
    %8 = vector.broadcast %cst_3 : f32 to vector<8x128xf32>
    %9 = arith.mulf %7, %8 : vector<8x128xf32>
    %c0_4 = arith.constant 0 : index
    %c0_5 = arith.constant 0 : index
    %10 = vector.load %arg3[%c0_4, %c0_5] : memref<8x128xf32, #tpu.memory_space<vmem>>, vector<8x128xf32>
    tpu.vector_store %arg3[%c0_4, %c0_5], %9 {strides = array<i32>} : memref<8x128xf32, #tpu.memory_space<vmem>>, vector<8x128xf32>,
    return
  }
  func.func @transform_0(%arg0: i32) -> (i32, i32) {
    %c0_i32 = arith.constant 0 : i32
    %c0_i32_0 = arith.constant 0 : i32
    return %arg0, %c0_i32 : i32, i32
  }
  func.func @transform_1(%arg0: i32) -> (i32, i32) {
    %c0_i32 = arith.constant 0 : i32
    %c0_i32_0 = arith.constant 0 : i32
    %c0_i32_1 = arith.constant 0 : i32
    return %c0_i32, %c0_i32_0 : i32, i32
  }
  func.func @transform_2(%arg0: i32) -> (i32, i32) {
    %c0_i32 = arith.constant 0 : i32
    %c0_i32_0 = arith.constant 0 : i32
    return %arg0, %c0_i32 : i32, i32
  }
}

</mosaic_0001>

<llo_original>
// kernel: tpu_custom_call.1
$region0: #{tpu_custom_call.1}
  #allocation0 [shape = 'u32[]', space=smem, size = 0x4, offset = 0x4, fixed_abs, tag = 'smem constant byte address 0x4 - core index']
  #allocation1 [shape = 'u32[144,128]{1,0:T(1,128)}', space=vmem, size = 0x12000, scoped, tag = 'internal scratch']
  %s0 = inlined_call_operand.vmem [shape: s32[16,1], index: 0, kind: input, shape index: {}]
  %s1 = inlined_call_operand.hbm [shape: f32[256,128], index: 1, kind: input, shape index: {}]
  %s2 = inlined_call_operand.hbm [shape: f32[16,128], index: 2, kind: output, shape index: {}]
  %s3 = sld [smem:[#allocation0]]
  $region45: #{tpu_custom_call.1} parent=0
    _
  %s5 = ssub.s32 1, %s3
  %s6 = scalar_select 0, %s5, %s3
  $region1: #{tpu_custom_call.1} parent=0
    #allocation2 [shape = 'u8[131072]{0}', space=vmem, size = 0x20000, scoped, tag = 'input window, operand 1, single buffered']
    #allocation3 [shape = 's32[2]{0}', space=sflag, size = 0x8, scoped, tag = 'scoped memory for tpu_custom_call.1']
    #allocation4 [shape = 's32[2]{0}', space=sflag, size = 0x8, scoped, tag = 'scoped memory for tpu_custom_call.1']
    #allocation5 [shape = 'u8[8192]{0}', space=vmem, size = 0x2000, scoped, tag = 'output window, operand 0']
    %7 = vsyncpa [#allocation3], 0
    %8 = vsyncpa [#allocation4], 0
    %s9 = scalar_lea.sflag [#allocation4], 1
    %10 = vsyncpa %s9, 0
    loop: start=0, step=1, limit=4
    $region2: #{tpu_custom_call.1} parent=1 // loop_pre_header
      _
    $region3: #{tpu_custom_call.1} parent=1 // loop_header
      %s12 = sphi 0, %s16
      %p13 = scmp.ge.s32.totalorder %s12, 4
      %s22 = sphi 0, %s24
      %s25 = sphi 0, %s22
      %s26 = sphi 0, %s25
      %s42 = sphi 0, %s26
      %s46 = sphi 0, %s46
      %s48 = sphi 0, %s46
      %s49 = sphi 0, %s48
      %s63 = sphi 0, %s49
      %s69 = sphi 0, %s71
      %s72 = sphi 0, %s69
      %s73 = sphi 0, %s72
      %s89 = sphi 0, %s73
    $region4: #{tpu_custom_call.1} parent=1 // loop_header_branch
      %15 = sbr.rel (%p13) target = $region8
    $region5: #{tpu_custom_call.1} parent=1 // loop_body
      %s17 = ssub.s32 %s12, 1
      %s18 = ssub.s32 %s12, 2
      %s19 = sadd.s32 %s12, 1
      %s20 = ssub.s32 %s12, %s19
      %p21 = scmp.eq.s32.totalorder %s20, 0
      %s23 = sadd.s32 %s22, 1
      %s24 = scalar_select %p21, %s22, %s23
      %p27 = pneg %p21
      %p28 = scmp.eq.s32.totalorder %s12, 1
      %p29 = por %p27, %p28
      %p30 = scmp.ne.s32.totalorder %s22, %s25
      %p31 = scmp.eq.s32.totalorder %s12, 0
      %p32 = por %p30, %p31
      %p33 = scmp.ne.s32.totalorder %s22, %s25
      %p34 = scmp.eq.s32.totalorder %s17, 1
      %p35 = por %p33, %p34
      %p36 = scmp.ne.s32.totalorder %s25, %s26
      %p37 = scmp.eq.s32.totalorder %s17, 0
      %p38 = por %p36, %p37
      %p39 = scmp.ne.s32.totalorder %s25, %s26
      %p40 = scmp.eq.s32.totalorder %s18, 1
      %p41 = por %p39, %p40
      %p43 = scmp.ne.s32.totalorder %s26, %s42
      %p44 = scmp.eq.s32.totalorder %s18, 0
      %p45 = por %p43, %p44
      %s47 = sadd.s32 %s46, 1
      %p50 = scmp.eq.s32.totalorder %s12, 1
      %p51 = scmp.ne.s32.totalorder %s46, %s48
      %p52 = scmp.eq.s32.totalorder %s12, 0
      %p53 = por %p51, %p52
      %p54 = scmp.ne.s32.totalorder %s46, %s48
      %p55 = scmp.eq.s32.totalorder %s17, 1
      %p56 = por %p54, %p55
      %p57 = scmp.ne.s32.totalorder %s48, %s49
      %p58 = scmp.eq.s32.totalorder %s17, 0
      %p59 = por %p57, %p58
      %p60 = scmp.ne.s32.totalorder %s48, %s49
      %p61 = scmp.eq.s32.totalorder %s18, 1
      %p62 = por %p60, %p61
      %p64 = scmp.ne.s32.totalorder %s49, %s63
      %p65 = scmp.eq.s32.totalorder %s18, 0
      %p66 = por %p64, %p65
      %s67 = ssub.s32 %s12, %s19
      %p68 = scmp.eq.s32.totalorder %s67, 0
      %s70 = sadd.s32 %s69, 1
      %s71 = scalar_select %p68, %s69, %s70
      %p74 = pneg %p68
      %p75 = scmp.eq.s32.totalorder %s12, 1
      %p76 = por %p74, %p75
      %p77 = scmp.ne.s32.totalorder %s69, %s72
      %p78 = scmp.eq.s32.totalorder %s12, 0
      %p79 = por %p77, %p78
      %p80 = scmp.ne.s32.totalorder %s69, %s72
      %p81 = scmp.eq.s32.totalorder %s17, 1
      %p82 = por %p80, %p81
      %p83 = scmp.ne.s32.totalorder %s72, %s73
      %p84 = scmp.eq.s32.totalorder %s17, 0
      %p85 = por %p83, %p84
      %p86 = scmp.ne.s32.totalorder %s72, %s73
      %p87 = scmp.eq.s32.totalorder %s18, 1
      %p88 = por %p86, %p87
      %p90 = scmp.ne.s32.totalorder %s73, %s89
      %p91 = scmp.eq.s32.totalorder %s18, 0
      %p92 = por %p90, %p91
      %p93 = scmp.le.s32.totalorder 1, %s12
      %p94 = scmp.lt.s32.totalorder %s12, 3
      %p95 = pnand %p93, %p94
      %p96 = pneg %p95
      // Predicated region
      $region9: #{tpu_custom_call.1} parent=5 // pred_check
        _
      $region10: #{tpu_custom_call.1} parent=5 // pred_check_branch
        %98 = sbr.rel (%p95) target = $region12
      $region11: #{tpu_custom_call.1} parent=5 // pred_region
        %s99 = ssub.s32 %s12, 1
        // Predicated region
        $region13: #{tpu_custom_call.1} parent=11 // pred_check
          %p100 = pneg %p59
        $region14: #{tpu_custom_call.1} parent=11 // pred_check_branch
          %102 = sbr.rel (%p100) target = $region16
        $region15: #{tpu_custom_call.1} parent=11 // pred_region
          %s104 = ssub.s32 4096, 4096
          %105 = vsyncadd [#allocation3], %s104
          %s106 = sshll.u32 [#allocation2], 4
          %s107 = int_to_ptr.vmem [resolvable:$true] %s106
          %112 = dma.hbm_to_vmem [thread:$0]  %s1, 4096, %s107, [#allocation3], 128, 128, 8
        $region16: #{tpu_custom_call.1} parent=11 // pred_fallthru
          _
      $region12: #{tpu_custom_call.1} parent=5 // pred_fallthru
        _
      %p113 = scmp.lt.s32.totalorder %s12, 2
      // Predicated region
      $region17: #{tpu_custom_call.1} parent=5 // pred_check
        %p114 = pneg %p113
      $region18: #{tpu_custom_call.1} parent=5 // pred_check_branch
        %116 = sbr.rel (%p114) target = $region20
      $region19: #{tpu_custom_call.1} parent=5 // pred_region
        // Predicated region
        $region21: #{tpu_custom_call.1} parent=19 // pred_check
          %p117 = pneg %p32
        $region22: #{tpu_custom_call.1} parent=19 // pred_check_branch
          %119 = sbr.rel (%p117) target = $region24
        $region23: #{tpu_custom_call.1} parent=19 // pred_region
          %p120 = scmp.lt.s32.totalorder %s12, 1
          %s121 = scalar_select %p120, %s12, 1
          %s122 = smul.addr %s121, 8
          %s123 = scalar_lea.vmem %s0, %s122
        $region24: #{tpu_custom_call.1} parent=19 // pred_fallthru
          _
      $region20: #{tpu_custom_call.1} parent=5 // pred_fallthru
        _
      %p124 = scmp.le.s32.totalorder 1, %s12
      %p125 = scmp.lt.s32.totalorder %s12, 3
      %p126 = pnand %p124, %p125
      %p127 = pneg %p126
      // Predicated region
      $region25: #{tpu_custom_call.1} parent=5 // pred_check
        _
      $region26: #{tpu_custom_call.1} parent=5 // pred_check_branch
        %129 = sbr.rel (%p126) target = $region28
      $region27: #{tpu_custom_call.1} parent=5 // pred_region
        %s130 = ssub.s32 %s12, 1
        // Predicated region
        $region29: #{tpu_custom_call.1} parent=27 // pred_check
          %p131 = pneg %p59
        $region30: #{tpu_custom_call.1} parent=27 // pred_check_branch
          %133 = sbr.rel (%p131) target = $region32
        $region31: #{tpu_custom_call.1} parent=27 // pred_region
          %134 = dma.done [#allocation3], 4096
        $region32: #{tpu_custom_call.1} parent=27 // pred_fallthru
          _
        %p135 = scmp.lt.s32.totalorder %s17, 1
        %s136 = scalar_select %p135, %s17, 1
        %s137 = smul.addr %s136, 8
        %s138 = scalar_lea.vmem %s0, %s137
        %p139 = pneg %p38
        %p140 = pneg %p35
        %p141 = pneg %p59
        %p142 = pneg %p56
        %p143 = pneg %p85
        %p144 = pneg %p82
        %s145 = sand.u32 %s72, 1
        %s146 = scalar_lea.sflag [#allocation4], %s145
        %s147 = sand.u32 %s72, 1
        %s148 = smul.addr %s147, 8
        %s149 = scalar_lea.vmem [#allocation5], %s148
        %p150 = scmp.lt.s32.totalorder %s17, 1
        %s151 = scalar_select %p150, %s17, 1
        %s152 = smul.addr %s151, 8
        %s153 = scalar_lea.vmem %s0, %s152
        %v154 = vld [vmem:[%s153] sm:$0xff]
        %v155 = vlaneseq
        %v156 = vand.u32 %v155, 127
        %v157 = vadd.s32 %v156, 128
        %158 = vset.pattern.permute.xlu0 0
        %159 = vperm.xlu0 %158, %v154
        %v160 = vpop.permute.xlu0 %159
        %vm161 = vcmp.eq.s32.totalorder %v156, %v160
        %vm162 = vcmp.eq.s32.totalorder %v157, %v160
        %v163 = vsel %vm161, 1, 0
        %v164 = vsel %vm162, 1, 0
        %v165 = vcvt.s32.f32 %v163
        %v166 = vcvt.s32.f32 %v164
        %v167 = vld [vmem:[#allocation2] sm:$0xff]
        %v168 = vld [vmem:[#allocation2 + $0x8] sm:$0xff]
        %v169 = vld [vmem:[#allocation2 + $0x10] sm:$0xff]
        %v170 = vld [vmem:[#allocation2 + $0x18] sm:$0xff]
        %v171 = vld [vmem:[#allocation2 + $0x20] sm:$0xff]
        %v172 = vld [vmem:[#allocation2 + $0x28] sm:$0xff]
        %v173 = vld [vmem:[#allocation2 + $0x30] sm:$0xff]
        %v174 = vld [vmem:[#allocation2 + $0x38] sm:$0xff]
        %v175 = vld [vmem:[#allocation2 + $0x40] sm:$0xff]
        %v176 = vld [vmem:[#allocation2 + $0x48] sm:$0xff]
        %v177 = vld [vmem:[#allocation2 + $0x50] sm:$0xff]
        %v178 = vld [vmem:[#allocation2 + $0x58] sm:$0xff]
        %v179 = vld [vmem:[#allocation2 + $0x60] sm:$0xff]
        %v180 = vld [vmem:[#allocation2 + $0x68] sm:$0xff]
        %v181 = vld [vmem:[#allocation2 + $0x70] sm:$0xff]
        %v182 = vld [vmem:[#allocation2 + $0x78] sm:$0xff]
        %v183 = vld [vmem:[#allocation2 + $0x80] sm:$0xff]
        %v184 = vld [vmem:[#allocation2 + $0x88] sm:$0xff]
        %v185 = vld [vmem:[#allocation2 + $0x90] sm:$0xff]
        %v186 = vld [vmem:[#allocation2 + $0x98] sm:$0xff]
        %v187 = vld [vmem:[#allocation2 + $0xa0] sm:$0xff]
        %v188 = vld [vmem:[#allocation2 + $0xa8] sm:$0xff]
        %v189 = vld [vmem:[#allocation2 + $0xb0] sm:$0xff]
        %v190 = vld [vmem:[#allocation2 + $0xb8] sm:$0xff]
        %v191 = vld [vmem:[#allocation2 + $0xc0] sm:$0xff]
        %v192 = vld [vmem:[#allocation2 + $0xc8] sm:$0xff]
        %v193 = vld [vmem:[#allocation2 + $0xd0] sm:$0xff]
        %v194 = vld [vmem:[#allocation2 + $0xd8] sm:$0xff]
        %v195 = vld [vmem:[#allocation2 + $0xe0] sm:$0xff]
        %v196 = vld [vmem:[#allocation2 + $0xe8] sm:$0xff]
        %v197 = vld [vmem:[#allocation2 + $0xf0] sm:$0xff]
        %v198 = vld [vmem:[#allocation2 + $0xf8] sm:$0xff]
        %199 = vmatprep.subr.mxu0 0.0
        %200 = vmatpush1.msra.mxu0 %v167
        %201 = vmatprep.subr.mxu0 0.0
        %202 = vmatpush1.msra.mxu0 %v168
        %203 = vmatprep.subr.mxu0 0.0
        %204 = vmatpush1.msra.mxu0 %v169
        %205 = vmatprep.subr.mxu0 0.0
        %206 = vmatpush1.msra.mxu0 %v170
        %207 = vmatprep.subr.mxu0 0.0
        %208 = vmatpush1.msra.mxu0 %v171
        %209 = vmatprep.subr.mxu0 0.0
        %210 = vmatpush1.msra.mxu0 %v172
        %211 = vmatprep.subr.mxu0 0.0
        %212 = vmatpush1.msra.mxu0 %v173
        %213 = vmatprep.subr.mxu0 0.0
        %214 = vmatpush1.msra.mxu0 %v174
        %215 = vmatprep.subr.mxu0 0.0
        %216 = vmatpush1.msra.mxu0 %v175
        %217 = vmatprep.subr.mxu0 0.0
        %218 = vmatpush1.msra.mxu0 %v176
        %219 = vmatprep.subr.mxu0 0.0
        %220 = vmatpush1.msra.mxu0 %v177
        %221 = vmatprep.subr.mxu0 0.0
        %222 = vmatpush1.msra.mxu0 %v178
        %223 = vmatprep.subr.mxu0 0.0
        %224 = vmatpush1.msra.mxu0 %v179
        %225 = vmatprep.subr.mxu0 0.0
        %226 = vmatpush1.msra.mxu0 %v180
        %227 = vmatprep.subr.mxu0 0.0
        %228 = vmatpush1.msra.mxu0 %v181
        %229 = vmatprep.subr.mxu0 0.0
        %230 = vmatpush1.msra.mxu0 %v182
        %231 = vmatprep.subr.mxu0 0.0
        %232 = vmatpush1.msra.mxu0 %v183
        %233 = vmatprep.subr.mxu0 0.0
        %234 = vmatpush1.msra.mxu0 %v184
        %235 = vmatprep.subr.mxu0 0.0
        %236 = vmatpush1.msra.mxu0 %v185
        %237 = vmatprep.subr.mxu0 0.0
        %238 = vmatpush1.msra.mxu0 %v186
        %239 = vmatprep.subr.mxu0 0.0
        %240 = vmatpush1.msra.mxu0 %v187
        %241 = vmatprep.subr.mxu0 0.0
        %242 = vmatpush1.msra.mxu0 %v188
        %243 = vmatprep.subr.mxu0 0.0
        %244 = vmatpush1.msra.mxu0 %v189
        %245 = vmatprep.subr.mxu0 0.0
        %246 = vmatpush1.msra.mxu0 %v190
        %247 = vmatprep.subr.mxu0 0.0
        %248 = vmatpush1.msra.mxu0 %v191
        %249 = vmatprep.subr.mxu0 0.0
        %250 = vmatpush1.msra.mxu0 %v192
        %251 = vmatprep.subr.mxu0 0.0
        %252 = vmatpush1.msra.mxu0 %v193
        %253 = vmatprep.subr.mxu0 0.0
        %254 = vmatpush1.msra.mxu0 %v194
        %255 = vmatprep.subr.mxu0 0.0
        %256 = vmatpush1.msra.mxu0 %v195
        %257 = vmatprep.subr.mxu0 0.0
        %258 = vmatpush1.msra.mxu0 %v196
        %259 = vmatprep.subr.mxu0 0.0
        %260 = vmatpush1.msra.mxu0 %v197
        %261 = vmatprep.subr.mxu0 0.0
        %262 = vmatpush1.msra.mxu0 %v198
        %263 = vmatprep.mubr.f32.mxu0 %v166
        %264 = vmatmul.mubr.f32.gmra.mrb[0].mxu0 %v165
        %v265 = vpop.f32.mrb[0].mxu0
        %v266 = vadd.f32 0.0, %v265
        %v267 = vpop.f32.mrb[0].mxu0
        %268 = vdwg.mxu0
        %v269 = vmul.f32 %v266, 11.313708
        %270 = vst [vmem:[%s149] sm:$0xff] %v269
        %s271 = sand.u32 %s72, 1
        %s272 = scalar_lea.sflag [#allocation4], %s271
        %s273 = sand.u32 %s72, 1
        %s274 = smul.addr %s273, 8
        %s275 = scalar_lea.vmem [#allocation5], %s274
        // Predicated region
        $region33: #{tpu_custom_call.1} parent=27 // pred_check
          %p276 = pneg %p82
        $region34: #{tpu_custom_call.1} parent=27 // pred_check_branch
          %278 = sbr.rel (%p276) target = $region36
        $region35: #{tpu_custom_call.1} parent=27 // pred_region
          %s280 = ssub.s32 128, 128
          %281 = vsyncadd %s272, %s280
          %s282 = smul.addr %s17, 128
          %s283 = scalar_lea.hbm %s2, %s282
          %s285 = sshll.u32 %s275, 4
          %s286 = int_to_ptr.vmem [resolvable:$true] %s285
          %288 = dma.vmem_to_hbm [thread:$0]  %s286, 128, %s283, %s272
        $region36: #{tpu_custom_call.1} parent=27 // pred_fallthru
          _
      $region28: #{tpu_custom_call.1} parent=5 // pred_fallthru
        _
      %p289 = scmp.le.s32.totalorder 2, %s12
      // Predicated region
      $region37: #{tpu_custom_call.1} parent=5 // pred_check
        %p290 = pneg %p289
      $region38: #{tpu_custom_call.1} parent=5 // pred_check_branch
        %292 = sbr.rel (%p290) target = $region40
      $region39: #{tpu_custom_call.1} parent=5 // pred_region
        %s293 = ssub.s32 %s12, 2
        // Predicated region
        $region41: #{tpu_custom_call.1} parent=39 // pred_check
          %p294 = pneg %p88
        $region42: #{tpu_custom_call.1} parent=39 // pred_check_branch
          %296 = sbr.rel (%p294) target = $region44
        $region43: #{tpu_custom_call.1} parent=39 // pred_region
          %s297 = sand.u32 %s73, 1
          %s298 = scalar_lea.sflag [#allocation4], %s297
          %s299 = sand.u32 %s73, 1
          %s300 = smul.addr %s299, 8
          %s301 = scalar_lea.vmem [#allocation5], %s300
          %302 = dma.done %s298, 128
        $region44: #{tpu_custom_call.1} parent=39 // pred_fallthru
          _
      $region40: #{tpu_custom_call.1} parent=5 // pred_fallthru
        _
    $region6: #{tpu_custom_call.1} parent=1 // loop_footer
      %s16 = sadd.s32 1, %s12
    $region7: #{tpu_custom_call.1} parent=1 // loop_footer_branch
      %11 = sbr.rel target = $region3
    $region8: #{tpu_custom_call.1} parent=1 // loop_exit
      _
    %303 = vsyncpa [#allocation3], 1
    %s304 = scalar_lea.sflag [#allocation3], 1
    %305 = vsyncpa %s304, 1
    %306 = vsyncpa [#allocation4], 1
    %s307 = scalar_lea.sflag [#allocation4], 1
    %308 = vsyncpa %s307, 1

</llo_original>
